<compile_context>
chip_gen: v5e
topology: v5e:2x2
jax: 0.10.0
libtpu: 0.0.40
codegen_flags: <defaults>
</compile_context>

<pallas_src>
from functools import partial

import jax
import jax.numpy as jnp
from jax.experimental import pallas as pl
from jax.experimental.pallas import tpu as pltpu


# -------------------------- kernels --------------------------

def _linear_kernel(x_ref, w_ref, b_ref, o_ref):
    # o_tile = x @ W_tile + b_tile   (W passed already transposed: (n_embd, n_pad))
    o_ref[...] = (
        jnp.dot(x_ref[...], w_ref[...], preferred_element_type=jnp.float32)
        + b_ref[...]
    )


def _linear_masked_kernel(x_ref, w_ref, b_ref, idx_ref, o_ref):
    logits = (
        jnp.dot(x_ref[...], w_ref[...], preferred_element_type=jnp.float32)
        + b_ref[...]
    )
    idx = idx_ref[...]                                    # (B, K_pad) int32
    valid = idx != -1
    # Reproduce torch exactly: masked_indices.clamp(0) * valid_mask
    # (invalid (-1) entries scatter an unmask into column 0, as in the original)
    eff = jnp.maximum(idx, 0) * valid.astype(idx.dtype)   # (B, K_pad)

    B, TN = logits.shape
    K = idx.shape[1]                                      # static
    # Global column index of this output tile (grid is over the padded N dim).
    col = pl.program_id(0) * TN + jax.lax.broadcasted_iota(jnp.int32, (B, TN), 1)

    # Unrolled K-wide membership test on 2-D vregs, reduced as a balanced OR tree
    # (depth ~log2(K)) so the 4 VALU slots co-issue under the MXU-pop latency.
    hits = [col == eff[:, k:k + 1] for k in range(K)]
    while len(hits) > 1:
        nxt = [jnp.logical_or(hits[i], hits[i + 1]) for i in range(0, len(hits) - 1, 2)]
        if len(hits) % 2:
            nxt.append(hits[-1])
        hits = nxt
    hit = hits[0]

    # Equivalent to logits + where(hit, 0, -inf) for finite logits, but cheaper.
    o_ref[...] = jnp.where(hit, logits, jnp.float32(-jnp.inf))


# -------------------------- pallas wrappers --------------------------

_VMEM_LIMIT = 48 * 1024 * 1024  # headroom below v7x's 64 MiB physical VMEM


def _pick_tile(n_pad):
    # Prefer 512/256-wide tiles (v6e/v7x MXU is 2x256^2); 128 is the floor (v5e 4x128^2).
    for t in (512, 256, 128):
        if n_pad % t == 0:
            return t
    return n_pad


def _pallas_linear(x, w_t, b2d):
    B, n_embd = x.shape
    n_pad = w_t.shape[1]
    tn = _pick_tile(n_pad)
    return pl.pallas_call(
        _linear_kernel,
        out_shape=jax.ShapeDtypeStruct((B, n_pad), jnp.float32),
        grid=(n_pad // tn,),
        in_specs=[
            pl.BlockSpec((B, n_embd), lambda j: (0, 0)),
            pl.BlockSpec((n_embd, tn), lambda j: (0, j)),
            pl.BlockSpec((1, tn), lambda j: (0, j)),
        ],
        out_specs=pl.BlockSpec((B, tn), lambda j: (0, j)),
        compiler_params=pltpu.CompilerParams(
            dimension_semantics=("parallel",),
            vmem_limit_bytes=_VMEM_LIMIT,
        ),
    )(x, w_t, b2d)


def _pallas_linear_masked(x, w_t, b2d, idx):
    B, n_embd = x.shape
    n_pad = w_t.shape[1]
    k_pad = idx.shape[1]
    tn = _pick_tile(n_pad)
    return pl.pallas_call(
        _linear_masked_kernel,
        out_shape=jax.ShapeDtypeStruct((B, n_pad), jnp.float32),
        grid=(n_pad // tn,),
        in_specs=[
            pl.BlockSpec((B, n_embd), lambda j: (0, 0)),
            pl.BlockSpec((n_embd, tn), lambda j: (0, j)),
            pl.BlockSpec((1, tn), lambda j: (0, j)),
            pl.BlockSpec((B, k_pad), lambda j: (0, 0)),
        ],
        out_specs=pl.BlockSpec((B, tn), lambda j: (0, j)),
        compiler_params=pltpu.CompilerParams(
            dimension_semantics=("parallel",),
            vmem_limit_bytes=_VMEM_LIMIT,
        ),
    )(x, w_t, b2d, idx)


# -------------------------- jitted forwards (fuse padding/slice around the kernel) ----------

@partial(jax.jit, static_argnames=("n_out",))
def _jit_forward(x, w_t, b2d, *, n_out):
    if x.dtype != w_t.dtype:
        x = x.astype(w_t.dtype)          # bf16 weights -> bf16 activations, f32 accumulate
    out = _pallas_linear(x, w_t, b2d)
    return out[:, :n_out]                # fuses into the jitted executable


@partial(jax.jit, static_argnames=("n_out",))
def _jit_forward_masked(x, w_t, b2d, masked_indices, *, n_out):
    if x.dtype != w_t.dtype:
        x = x.astype(w_t.dtype)
    n_pad = w_t.shape[1]
    idx = masked_indices.astype(jnp.int32)
    # Pad K up to a multiple of 8 with the out-of-range sentinel `n_pad`
    # (clamp(0)*valid leaves it as n_pad, which never matches a column -> no-op).
    K = idx.shape[1]
    k_pad = max(8, ((K + 7) // 8) * 8)
    if k_pad != K:
        pad = jnp.full((idx.shape[0], k_pad - K), n_pad, jnp.int32)
        idx = jnp.concatenate([idx, pad], axis=1)
    out = _pallas_linear_masked(x, w_t, b2d, idx)
    return out[:, :n_out]


# -------------------------- module --------------------------

class PolicyHead:
    """JAX/Pallas port of the PyTorch PolicyHead.

    param_dtype=jnp.bfloat16 gives the MXU-native bf16xbf16->f32 path (halves weight
    DMA/VMEM bytes at scale); default float32 keeps the torch module's exact numerics.
    """

    def __init__(self, n_embd, n_possible_moves, n_moves_reevaluate, key,
                 param_dtype=jnp.float32):
        k1, k2, k3, k4 = jax.random.split(key, 4)
        # nn.Linear shapes: weight (out, in), bias (out,)  (kept for the reference check)
        self.fc_w = jax.random.normal(k1, (n_possible_moves, n_embd), jnp.float32) * 0.02
        self.fc_b = jax.random.normal(k2, (n_possible_moves,), jnp.float32) * 0.02
        self.fc2_w = jax.random.normal(k3, (n_moves_reevaluate, n_embd), jnp.float32) * 0.02
        self.fc2_b = jax.random.normal(k4, (n_moves_reevaluate,), jnp.float32) * 0.02

        # Pre-transpose to (n_embd, n_out) and zero-pad n_out to a multiple of 128 so the
        # kernel's output tiles are lane-dense. Done once at init, not per forward.
        def _prep(w, b):
            n_out = w.shape[0]
            n_pad = max(128, ((n_out + 127) // 128) * 128)
            w_t = jnp.zeros((w.shape[1], n_pad), jnp.float32).at[:, :n_out].set(w.T)
            b2d = jnp.zeros((1, n_pad), jnp.float32).at[:, :n_out].set(b)
            return w_t.astype(param_dtype), b2d, n_out   # bias stays f32 (added post-MXU)

        self._fc_prepped = _prep(self.fc_w, self.fc_b)
        self._fc2_prepped = _prep(self.fc2_w, self.fc2_b)

        # TODO(synk): for very large n_possible_moves, add a masked-path variant that
        # scalar-prefetches masked_indices and gathers only the K selected weight columns
        # (cuts FLOPs/weight-DMA by ~N/K); not worth it at the single-MXU-push sizes here.

    def __call__(self, x, forward_pass="first", masked_indices=None):
        if forward_pass == "first":
            w_t, b2d, n_out = self._fc_prepped
        else:
            w_t, b2d, n_out = self._fc2_prepped

        if masked_indices is None:
            return _jit_forward(x, w_t, b2d, n_out=n_out)
        return _jit_forward_masked(x, w_t, b2d, masked_indices, n_out=n_out)


# -------------------------- reference (pure JAX) --------------------------

def _ref_forward(x, w, b, masked_indices=None):
    out = x @ w.T + b
    if masked_indices is not None:
        valid = masked_indices != -1
        eff = jnp.maximum(masked_indices, 0) * valid.astype(masked_indices.dtype)
        mask = jnp.full_like(out, -jnp.inf)
        rows = jnp.arange(out.shape[0])[:, None]
        mask = mask.at[rows, eff].set(0.0)   # torch scatter_(1, idx, 0)
        out = out + mask
    return out


# -------------------------- main --------------------------

if __name__ == "__main__":
    B, n_embd = 8, 32
    n_possible_moves, n_moves_reevaluate = 128, 64

    key = jax.random.PRNGKey(0)
    k_param, k_x, k_idx = jax.random.split(key, 3)

    head = PolicyHead(n_embd, n_possible_moves, n_moves_reevaluate, k_param)

    x = jax.random.normal(k_x, (B, n_embd), jnp.float32)
    # masked_indices: (B, 5) valid move indices in [0, n_possible_moves), with some -1 padding
    masked_indices = jax.random.randint(k_idx, (B, 5), 0, n_possible_moves, jnp.int32)
    masked_indices = masked_indices.at[0, 3:].set(-1)
    masked_indices = masked_indices.at[3, 1:].set(-1)

    # first pass, no mask
    y0 = jax.block_until_ready(head(x, forward_pass="first"))
    # first pass, with "masked_softmax" (additive -inf mask)
    y1 = jax.block_until_ready(head(x, forward_pass="first", masked_indices=masked_indices))
    # second pass (fc2), no mask
    y2 = jax.block_until_ready(head(x, forward_pass="second"))

    r0 = _ref_forward(x, head.fc_w, head.fc_b)
    r1 = _ref_forward(x, head.fc_w, head.fc_b, masked_indices)
    r2 = _ref_forward(x, head.fc2_w, head.fc2_b)

    assert y0.shape == (B, n_possible_moves) and y2.shape == (B, n_moves_reevaluate)
    assert jnp.allclose(y0, r0, atol=1e-5, rtol=1e-5)
    assert jnp.allclose(y1, r1, atol=1e-5, rtol=1e-5)
    assert jnp.allclose(y2, r2, atol=1e-5, rtol=1e-5)

    print("KERNEL_OK")
</pallas_src>

<mosaic_0001>
module attributes {stable_mosaic.version = 11 : i64} {
  func.func @_linear_kernel(%arg0: i32, %arg1: memref<8x32xf32, #tpu.memory_space<vmem>>, %arg2: memref<32x128xf32, #tpu.memory_space<vmem>>, %arg3: memref<1x128xf32, #tpu.memory_space<vmem>>, %arg4: memref<8x128xf32, #tpu.memory_space<vmem>>) attributes {dimension_semantics = [#tpu.dimension_semantics<parallel>], iteration_bounds = array<i64: 1>, scalar_prefetch = 0 : i64, scratch_operands = 0 : i64, tpu.core_type = #tpu.core_type<tc>, window_params = [{pipeline_mode = #tpu.pipeline_mode<synchronous>, transform_indices = @transform_0, window_bounds = array<i64: 8, 32>}, {transform_indices = @transform_1, window_bounds = array<i64: 32, 128>}, {transform_indices = @transform_2, window_bounds = array<i64: 1, 128>}, {transform_indices = @transform_3, window_bounds = array<i64: 8, 128>}]} {
    %c0 = arith.constant 0 : index
    %c0_0 = arith.constant 0 : index
    %0 = vector.load %arg1[%c0, %c0_0] : memref<8x32xf32, #tpu.memory_space<vmem>>, vector<8x32xf32>
    %c0_1 = arith.constant 0 : index
    %c0_2 = arith.constant 0 : index
    %1 = vector.load %arg2[%c0_1, %c0_2] : memref<32x128xf32, #tpu.memory_space<vmem>>, vector<32x128xf32>
    %cst = arith.constant dense<0.000000e+00> : vector<8x128xf32>
    %2 = tpu.matmul %0, %1, %cst {dimension_numbers = #tpu.dot_dimension_numbers<[1], [0], [0], [1], [0, 0, 1, 1], [], []>} : vector<8x32xf32>, vector<32x128xf32>, vector<8x128xf32> -> vector<8x128xf32>
    %c0_3 = arith.constant 0 : index
    %c0_4 = arith.constant 0 : index
    %3 = vector.load %arg3[%c0_3, %c0_4] : memref<1x128xf32, #tpu.memory_space<vmem>>, vector<1x128xf32>
    %4 = vector.broadcast %3 : vector<1x128xf32> to vector<8x128xf32>
    %5 = arith.addf %2, %4 : vector<8x128xf32>
    %c0_5 = arith.constant 0 : index
    %c0_6 = arith.constant 0 : index
    %6 = vector.load %arg4[%c0_5, %c0_6] : memref<8x128xf32, #tpu.memory_space<vmem>>, vector<8x128xf32>
    tpu.vector_store %arg4[%c0_5, %c0_6], %5 {strides = array<i32>} : memref<8x128xf32, #tpu.memory_space<vmem>>, vector<8x128xf32>,
    return
  }
  func.func @transform_0(%arg0: i32) -> (i32, i32) {
    %c0_i32 = arith.constant 0 : i32
    %c0_i32_0 = arith.constant 0 : i32
    %c0_i32_1 = arith.constant 0 : i32
    return %c0_i32, %c0_i32_0 : i32, i32
  }
  func.func @transform_1(%arg0: i32) -> (i32, i32) {
    %c0_i32 = arith.constant 0 : i32
    %c0_i32_0 = arith.constant 0 : i32
    return %c0_i32, %arg0 : i32, i32
  }
  func.func @transform_2(%arg0: i32) -> (i32, i32) {
    %c0_i32 = arith.constant 0 : i32
    %c0_i32_0 = arith.constant 0 : i32
    return %c0_i32, %arg0 : i32, i32
  }
  func.func @transform_3(%arg0: i32) -> (i32, i32) {
    %c0_i32 = arith.constant 0 : i32
    %c0_i32_0 = arith.constant 0 : i32
    return %c0_i32, %arg0 : i32, i32
  }
}

</mosaic_0001>

<llo_original>
// kernel: _jit_forward.1
$region0: #{_jit_forward.1}
  #allocation0 [shape = 'u32[]', space=smem, size = 0x4, offset = 0x4, fixed_abs, tag = 'smem constant byte address 0x4 - core index']
  #allocation1 [shape = 'u32[72,128]{1,0:T(1,128)}', space=vmem, size = 0x9000, scoped, tag = 'internal scratch']
  %s0 = inlined_call_operand.hbm [shape: f32[8,32], index: 0, kind: input, shape index: {}]
  %s1 = inlined_call_operand.hbm [shape: f32[32,128], index: 1, kind: input, shape index: {}]
  %s2 = inlined_call_operand.vmem [shape: f32[1,128], index: 2, kind: input, shape index: {}]
  %s3 = inlined_call_operand.hbm [shape: f32[8,128], index: 3, kind: output, shape index: {}]
  %s4 = sld [smem:[#allocation0]]
  $region30: #{_jit_forward.1} parent=0
    _
  %s6 = ssub.s32 1, %s4
  %s7 = scalar_select 0, %s6, %s4
  $region1: #{_jit_forward.1} parent=0
    #allocation2 [shape = 'u8[4096]{0}', space=vmem, size = 0x1000, scoped, tag = 'input window, operand 0, single buffered']
    #allocation3 [shape = 's32[1]{0}', space=sflag, size = 0x4, scoped, tag = 'scoped memory for _jit_forward.1']
    #allocation4 [shape = 's32[1]{0}', space=sflag, size = 0x4, scoped, tag = 'scoped memory for _jit_forward.1']
    #allocation5 [shape = 'u8[16384]{0}', space=vmem, size = 0x4000, scoped, tag = 'input window, operand 1, single buffered']
    #allocation6 [shape = 's32[1]{0}', space=sflag, size = 0x4, scoped, tag = 'scoped memory for _jit_forward.1']
    #allocation7 [shape = 'u8[4096]{0}', space=vmem, size = 0x1000, scoped, tag = 'output window, operand 0, single buffered']
    %8 = vsyncpa [#allocation3], 0
    %9 = vsyncpa [#allocation6], 0
    %10 = vsyncpa [#allocation4], 0
    // Predicated region
    $region2: #{_jit_forward.1} parent=1 // pred_check
      _
    $region3: #{_jit_forward.1} parent=1 // pred_check_branch
      %12 = sbr.rel (0) target = $region5
    $region4: #{_jit_forward.1} parent=1 // pred_region
      %14 = vsyncadd [#allocation3], 0
      %s16 = sshll.u32 %s0, 4
      %s17 = int_to_ptr.hbm [resolvable:$true] %s16
      %s18 = sshll.u32 [#allocation2], 4
      %s19 = int_to_ptr.vmem [resolvable:$true] %s18
      %21 = dma.hbm_to_vmem [thread:$0]  %s17, 128, %s19, [#allocation3]
    $region5: #{_jit_forward.1} parent=1 // pred_fallthru
      _
    // Predicated region
    $region6: #{_jit_forward.1} parent=1 // pred_check
      _
    $region7: #{_jit_forward.1} parent=1 // pred_check_branch
      %23 = sbr.rel (0) target = $region9
    $region8: #{_jit_forward.1} parent=1 // pred_region
      %25 = vsyncadd [#allocation6], 0
      %s26 = sshll.u32 %s1, 4
      %s27 = int_to_ptr.hbm [resolvable:$true] %s26
      %s28 = sshll.u32 [#allocation5], 4
      %s29 = int_to_ptr.vmem [resolvable:$true] %s28
      %34 = dma.hbm_to_vmem [thread:$0]  %s27, 512, %s29, [#allocation6], 128, 128, 8
    $region9: #{_jit_forward.1} parent=1 // pred_fallthru
      _
    // Predicated region
    $region10: #{_jit_forward.1} parent=1 // pred_check
      _
    $region11: #{_jit_forward.1} parent=1 // pred_check_branch
      %36 = sbr.rel (0) target = $region13
    $region12: #{_jit_forward.1} parent=1 // pred_region
      _
    $region13: #{_jit_forward.1} parent=1 // pred_fallthru
      _
    // Predicated region
    $region14: #{_jit_forward.1} parent=1 // pred_check
      _
    $region15: #{_jit_forward.1} parent=1 // pred_check_branch
      %38 = sbr.rel (0) target = $region17
    $region16: #{_jit_forward.1} parent=1 // pred_region
      %40 = dma.done [#allocation3], 128
    $region17: #{_jit_forward.1} parent=1 // pred_fallthru
      _
    // Predicated region
    $region18: #{_jit_forward.1} parent=1 // pred_check
      _
    $region19: #{_jit_forward.1} parent=1 // pred_check_branch
      %42 = sbr.rel (0) target = $region21
    $region20: #{_jit_forward.1} parent=1 // pred_region
      %44 = dma.done [#allocation6], 512
    $region21: #{_jit_forward.1} parent=1 // pred_fallthru
      _
    %v45 = vld [vmem:[#allocation2] sm:$0xff]
    %v46 = vld [vmem:[#allocation5] sm:$0xff]
    %v47 = vld [vmem:[#allocation5 + $0x8] sm:$0xff]
    %v48 = vld [vmem:[#allocation5 + $0x10] sm:$0xff]
    %v49 = vld [vmem:[#allocation5 + $0x18] sm:$0xff]
    %v50 = vld [vmem:[%s2] sm:$0x1]
    %v52 = vperm.slane %v50, 0
    %vm54 = vcmask 261120
    %v56 = vsel %vm54, %v45, 0
    %58 = vmatpush.msra.mxu0 0.0
    %59 = vmatpush.msra.mxu0 0.0
    %60 = vmatpush.msra.mxu0 0.0
    %61 = vmatpush.msra.mxu0 0.0
    %62 = vmatpush.msra.mxu0 0.0
    %63 = vmatpush.msra.mxu0 0.0
    %64 = vmatpush.msra.mxu0 0.0
    %65 = vmatpush.msra.mxu0 0.0
    %66 = vmatpush.msra.mxu0 0.0
    %67 = vmatpush.msra.mxu0 0.0
    %68 = vmatpush.msra.mxu0 0.0
    %69 = vmatpush.msra.mxu0 0.0
    %70 = vmatpush.msra.mxu0 %v49
    %71 = vmatpush.msra.mxu0 %v48
    %72 = vmatpush.msra.mxu0 %v47
    %73 = vmatpush.msra.mxu0 %v46
    %74 = vmatmul.f32.gmra.mxu0 %v56
    %v75 = vpop.f32.mrf.mxu0
    %v76 = vadd.f32 %v52, %v75
    %77 = vdwg.mxu0
    %78 = vst [vmem:[#allocation7] sm:$0xff] %v76
    // Predicated region
    $region22: #{_jit_forward.1} parent=1 // pred_check
      _
    $region23: #{_jit_forward.1} parent=1 // pred_check_branch
      %80 = sbr.rel (0) target = $region25
    $region24: #{_jit_forward.1} parent=1 // pred_region
      %82 = vsyncadd [#allocation4], 0
      %s84 = sshll.u32 [#allocation7], 4
      %s85 = int_to_ptr.vmem [resolvable:$true] %s84
      %s86 = sshll.u32 %s3, 4
      %s87 = int_to_ptr.hbm [resolvable:$true] %s86
      %89 = dma.vmem_to_hbm [thread:$0]  %s85, 128, %s87, [#allocation4]
    $region25: #{_jit_forward.1} parent=1 // pred_fallthru
      _
    // Predicated region
    $region26: #{_jit_forward.1} parent=1 // pred_check
      _
    $region27: #{_jit_forward.1} parent=1 // pred_check_branch
      %91 = sbr.rel (0) target = $region29
    $region28: #{_jit_forward.1} parent=1 // pred_region
      %93 = dma.done [#allocation4], 128
    $region29: #{_jit_forward.1} parent=1 // pred_fallthru
      _
    %94 = vsyncpa [#allocation3], 1
    %95 = vsyncpa [#allocation6], 1
    %96 = vsyncpa [#allocation4], 1

</llo_original>
